<compile_context>
chip_gen: v6e
topology: v6e:2x2x1
jax: 0.10.0
libtpu: 0.0.40
codegen_flags: <defaults>
</compile_context>

<pallas_src>
import jax
import jax.numpy as jnp
from jax.experimental import pallas as pl
from jax.experimental.pallas import tpu as pltpu

LANE = 128


def _round_up(x, m):
    return ((x + m - 1) // m) * m


def actor_mlp_kernel(x_ref,
                     vt1_ref, p1_ref,
                     vt2_ref, p2_ref,
                     vt3_ref, p3_ref,
                     out_ref):
    eps = 1e-5

    def wn_linear(h, vt, s, b):
        # weight_norm folded to the output side:
        #   (h @ W_eff.T)[r, i] = s[i] * (h @ v.T)[r, i],  s = g/||v||  (1, out)
        # vt is pre-transposed to (in, out) in the wrapper -> plain matmul,
        # no per-step weight transpose/relayout inside the grid loop.
        y = jnp.dot(h.astype(vt.dtype), vt, preferred_element_type=jnp.float32)
        return y * s + b

    def layer_norm(h, gamma, beta):
        mu = jnp.mean(h, axis=-1, keepdims=True)
        d = h - mu
        var = jnp.mean(d * d, axis=-1, keepdims=True)
        return d * jax.lax.rsqrt(var + eps) * gamma + beta

    h = x_ref[...]

    # hidden layer 1: packed params p1 = [s1; b1; ln1_w; ln1_b]  (4, h1)
    p1 = p1_ref[...]
    h = wn_linear(h, vt1_ref[...], p1[0:1, :], p1[1:2, :])
    h = jnp.maximum(layer_norm(h, p1[2:3, :], p1[3:4, :]), 0.0)   # ReLU

    # hidden layer 2: packed params p2 = [s2; b2; ln2_w; ln2_b]  (4, h2)
    p2 = p2_ref[...]
    h = wn_linear(h, vt2_ref[...], p2[0:1, :], p2[1:2, :])
    h = jnp.maximum(layer_norm(h, p2[2:3, :], p2[3:4, :]), 0.0)   # ReLU

    # output layer (no LayerNorm / activation); packed p3 = [s3; b3]  (2, 128)
    p3 = p3_ref[...]
    out_ref[...] = wn_linear(h, vt3_ref[...], p3[0:1, :], p3[1:2, :])


def actor_forward(state, params, *, max_block_b=4096, min_rows_per_core=512,
                  use_bf16=False):
    """Fused forward pass. `state`: (batch, state_size) f32."""
    batch, state_size = state.shape
    h1 = params["v1"].shape[0]
    h2 = params["v2"].shape[0]
    action_size = params["v3"].shape[0]
    out_pad = _round_up(action_size, LANE)   # lane-dense output block

    # -- weight prep (once per call, outside the grid loop) -------------------
    # Per-row weight-norm scale. Note: like PyTorch weight_norm, no epsilon ->
    # an all-zero v row gives inf.
    def wn_scale(v, g):
        return g * jax.lax.rsqrt(jnp.sum(v * v, axis=1))[None, :]   # (1, out)

    s1 = wn_scale(params["v1"], params["g1"])
    s2 = wn_scale(params["v2"], params["g2"])
    s3 = wn_scale(params["v3"], params["g3"])

    mm_dtype = jnp.bfloat16 if use_bf16 else jnp.float32

    # Pre-transpose v to (in, out) so the MXU-preferred (K, N) layout is
    # presented directly; output layer is zero-padded to 128 lanes.
    vt1 = params["v1"].T.astype(mm_dtype)                            # (S, h1)
    vt2 = params["v2"].T.astype(mm_dtype)                            # (h1, h2)
    vt3 = jnp.pad(params["v3"].T,
                  ((0, 0), (0, out_pad - action_size))).astype(mm_dtype)  # (h2, 128)
    s3p = jnp.pad(s3, ((0, 0), (0, out_pad - action_size)))
    b3p = jnp.pad(params["b3"], ((0, 0), (0, out_pad - action_size)))

    # Fuse the small per-layer vectors into one array per layer (fewer DMAs).
    p1 = jnp.concatenate(
        [s1, params["b1"], params["ln1_w"], params["ln1_b"]], axis=0)   # (4, h1)
    p2 = jnp.concatenate(
        [s2, params["b2"], params["ln2_w"], params["ln2_b"]], axis=0)   # (4, h2)
    p3 = jnp.concatenate([s3p, b3p], axis=0)                            # (2, 128)

    # -- batch tiling ----------------------------------------------------------
    rows = _round_up(batch, 8)                    # f32 sublane multiple
    if rows <= max_block_b:
        if rows >= 2 * min_rows_per_core:
            # v7x has 2 TensorCores; give the "parallel" axis >= 2 blocks.
            bb = _round_up(pl.cdiv(rows, 2), 8)
        else:
            bb = rows
    else:
        bb = max_block_b
    padded = _round_up(rows, bb)
    grid = (padded // bb,)

    x = state.astype(mm_dtype)
    if padded != batch:
        x = jnp.pad(x, ((0, padded - batch), (0, 0)))

    VMEM = pltpu.MemorySpace.VMEM

    def resident(shape):
        # Full-shape block, constant index_map -> stays in VMEM across grid steps.
        return pl.BlockSpec(shape, lambda i: (0, 0), memory_space=VMEM)

    in_specs = [
        pl.BlockSpec((bb, state_size), lambda i: (i, 0), memory_space=VMEM),  # x
        resident(vt1.shape), resident(p1.shape),
        resident(vt2.shape), resident(p2.shape),
        resident(vt3.shape), resident(p3.shape),
    ]
    out_specs = pl.BlockSpec((bb, out_pad), lambda i: (i, 0), memory_space=VMEM)

    param_bytes = sum(int(p.size) * p.dtype.itemsize
                      for p in (vt1, p1, vt2, p2, vt3, p3))
    cost = pl.CostEstimate(
        flops=2 * padded * (state_size * h1 + h1 * h2 + h2 * out_pad),
        transcendentals=2 * padded,                         # LayerNorm rsqrt per row
        bytes_accessed=param_bytes
        + padded * state_size * x.dtype.itemsize
        + 4 * padded * out_pad,
    )

    out = pl.pallas_call(
        actor_mlp_kernel,
        out_shape=jax.ShapeDtypeStruct((padded, out_pad), jnp.float32),
        grid=grid,
        in_specs=in_specs,
        out_specs=out_specs,
        compiler_params=pltpu.CompilerParams(
            dimension_semantics=("parallel",)),             # dual-TC on v7x
        cost_estimate=cost,
    )(x, vt1, p1, vt2, p2, vt3, p3)

    return out[:batch, :action_size]


def _reference_forward(state, p):
    def wn_linear(h, v, g, b):
        # g stored lane-major (1, out); reshape to (out, 1) for row scaling.
        w = v * (g.reshape(-1, 1) / jnp.linalg.norm(v, axis=1, keepdims=True))
        return h @ w.T + b

    def layer_norm(h, gamma, beta, eps=1e-5):
        mu = jnp.mean(h, axis=-1, keepdims=True)
        var = jnp.mean((h - mu) ** 2, axis=-1, keepdims=True)
        return (h - mu) / jnp.sqrt(var + eps) * gamma + beta

    h = wn_linear(state, p["v1"], p["g1"], p["b1"])
    h = jnp.maximum(layer_norm(h, p["ln1_w"], p["ln1_b"]), 0.0)
    h = wn_linear(h, p["v2"], p["g2"], p["b2"])
    h = jnp.maximum(layer_norm(h, p["ln2_w"], p["ln2_b"]), 0.0)
    return wn_linear(h, p["v3"], p["g3"], p["b3"])


def make_params(key, state_size, hidden_layers, action_size):
    sizes = [state_size, *hidden_layers, action_size]
    params = {}
    keys = jax.random.split(key, 2 * (len(sizes) - 1))
    for li in range(len(sizes) - 1):
        fan_in, fan_out = sizes[li], sizes[li + 1]
        kv, kb = keys[2 * li], keys[2 * li + 1]
        bound = 1.0 / jnp.sqrt(fan_in)
        v = jax.random.uniform(kv, (fan_out, fan_in), jnp.float32, -bound, bound)
        # weight_norm init: g = ||v|| per output row (so W_eff == v at init);
        # stored lane-major (1, out).
        g = jnp.linalg.norm(v, axis=1)[None, :]
        b = jax.random.uniform(kb, (1, fan_out), jnp.float32, -bound, bound)
        idx = li + 1
        params[f"v{idx}"] = v
        params[f"g{idx}"] = g
        params[f"b{idx}"] = b
        if li < len(hidden_layers):
            params[f"ln{idx}_w"] = jnp.ones((1, fan_out), jnp.float32)
            params[f"ln{idx}_b"] = jnp.zeros((1, fan_out), jnp.float32)
    return params


if __name__ == "__main__":
    state_size = 32
    hidden_layers = (64, 64)
    action_size = 8
    batch = 8

    key = jax.random.PRNGKey(0)
    k_params, k_x = jax.random.split(key)
    params = make_params(k_params, state_size, hidden_layers, action_size)
    state = jax.random.normal(k_x, (batch, state_size), jnp.float32)

    out = actor_forward(state, params)
    out = jax.block_until_ready(out)

    ref = _reference_forward(state, params)
    assert out.shape == (batch, action_size)
    assert jnp.allclose(out, ref, atol=1e-4, rtol=1e-4), "mismatch vs reference"

    print("KERNEL_OK")
</pallas_src>

<mosaic_0001>
module attributes {stable_mosaic.version = 11 : i64} {
  func.func @actor_mlp_kernel(%arg0: i32, %arg1: memref<8x32xf32, #tpu.memory_space<vmem>>, %arg2: memref<32x64xf32, #tpu.memory_space<vmem>>, %arg3: memref<4x64xf32, #tpu.memory_space<vmem>>, %arg4: memref<64x64xf32, #tpu.memory_space<vmem>>, %arg5: memref<4x64xf32, #tpu.memory_space<vmem>>, %arg6: memref<64x128xf32, #tpu.memory_space<vmem>>, %arg7: memref<2x128xf32, #tpu.memory_space<vmem>>, %arg8: memref<8x128xf32, #tpu.memory_space<vmem>>) attributes {dimension_semantics = [#tpu.dimension_semantics<parallel>], iteration_bounds = array<i64: 1>, scalar_prefetch = 0 : i64, scratch_operands = 0 : i64, tpu.core_type = #tpu.core_type<tc>, window_params = [{transform_indices = @transform_0, window_bounds = array<i64: 8, 32>}, {pipeline_mode = #tpu.pipeline_mode<synchronous>, transform_indices = @transform_1, window_bounds = array<i64: 32, 64>}, {pipeline_mode = #tpu.pipeline_mode<synchronous>, transform_indices = @transform_2, window_bounds = array<i64: 4, 64>}, {pipeline_mode = #tpu.pipeline_mode<synchronous>, transform_indices = @transform_3, window_bounds = array<i64: 64, 64>}, {pipeline_mode = #tpu.pipeline_mode<synchronous>, transform_indices = @transform_4, window_bounds = array<i64: 4, 64>}, {pipeline_mode = #tpu.pipeline_mode<synchronous>, transform_indices = @transform_5, window_bounds = array<i64: 64, 128>}, {pipeline_mode = #tpu.pipeline_mode<synchronous>, transform_indices = @transform_6, window_bounds = array<i64: 2, 128>}, {transform_indices = @transform_7, window_bounds = array<i64: 8, 128>}]} {
    %c0 = arith.constant 0 : index
    %c0_0 = arith.constant 0 : index
    %0 = vector.load %arg1[%c0, %c0_0] : memref<8x32xf32, #tpu.memory_space<vmem>>, vector<8x32xf32>
    %c0_1 = arith.constant 0 : index
    %c0_2 = arith.constant 0 : index
    %1 = vector.load %arg3[%c0_1, %c0_2] : memref<4x64xf32, #tpu.memory_space<vmem>>, vector<4x64xf32>
    %c0_3 = arith.constant 0 : index
    %c0_4 = arith.constant 0 : index
    %2 = vector.load %arg2[%c0_3, %c0_4] : memref<32x64xf32, #tpu.memory_space<vmem>>, vector<32x64xf32>
    %3 = vector.extract_strided_slice %1 {offsets = [0, 0], sizes = [1, 64], strides = [1, 1]} : vector<4x64xf32> to vector<1x64xf32>
    %4 = vector.extract_strided_slice %1 {offsets = [1, 0], sizes = [1, 64], strides = [1, 1]} : vector<4x64xf32> to vector<1x64xf32>
    %cst = arith.constant dense<0.000000e+00> : vector<8x64xf32>
    %5 = tpu.matmul %0, %2, %cst {dimension_numbers = #tpu.dot_dimension_numbers<[1], [0], [0], [1], [0, 0, 1, 1], [], []>} : vector<8x32xf32>, vector<32x64xf32>, vector<8x64xf32> -> vector<8x64xf32>
    %6 = vector.broadcast %3 : vector<1x64xf32> to vector<8x64xf32>
    %7 = arith.mulf %5, %6 : vector<8x64xf32>
    %8 = vector.broadcast %4 : vector<1x64xf32> to vector<8x64xf32>
    %9 = arith.addf %7, %8 : vector<8x64xf32>
    %10 = vector.extract_strided_slice %1 {offsets = [2, 0], sizes = [1, 64], strides = [1, 1]} : vector<4x64xf32> to vector<1x64xf32>
    %11 = vector.extract_strided_slice %1 {offsets = [3, 0], sizes = [1, 64], strides = [1, 1]} : vector<4x64xf32> to vector<1x64xf32>
    %cst_5 = arith.constant dense<0.000000e+00> : vector<8xf32>
    %12 = vector.multi_reduction <add>, %9, %cst_5 [1] : vector<8x64xf32> to vector<8xf32>
    %13 = vector.shape_cast %12 : vector<8xf32> to vector<8x1xf32>
    %cst_6 = arith.constant 6.400000e+01 : f32
    %14 = vector.broadcast %cst_6 : f32 to vector<8x1xf32>
    %15 = arith.divf %13, %14 : vector<8x1xf32>
    %16 = vector.broadcast %15 : vector<8x1xf32> to vector<8x64xf32>
    %17 = arith.subf %9, %16 : vector<8x64xf32>
    %18 = arith.mulf %17, %17 : vector<8x64xf32>
    %cst_7 = arith.constant dense<0.000000e+00> : vector<8xf32>
    %19 = vector.multi_reduction <add>, %18, %cst_7 [1] : vector<8x64xf32> to vector<8xf32>
    %20 = vector.shape_cast %19 : vector<8xf32> to vector<8x1xf32>
    %cst_8 = arith.constant 6.400000e+01 : f32
    %21 = vector.broadcast %cst_8 : f32 to vector<8x1xf32>
    %22 = arith.divf %20, %21 : vector<8x1xf32>
    %cst_9 = arith.constant 9.99999974E-6 : f32
    %23 = vector.broadcast %cst_9 : f32 to vector<8x1xf32>
    %24 = arith.addf %22, %23 : vector<8x1xf32>
    %25 = math.rsqrt %24 : vector<8x1xf32>
    %26 = vector.broadcast %25 : vector<8x1xf32> to vector<8x64xf32>
    %27 = arith.mulf %17, %26 : vector<8x64xf32>
    %28 = vector.broadcast %10 : vector<1x64xf32> to vector<8x64xf32>
    %29 = arith.mulf %27, %28 : vector<8x64xf32>
    %30 = vector.broadcast %11 : vector<1x64xf32> to vector<8x64xf32>
    %31 = arith.addf %29, %30 : vector<8x64xf32>
    %cst_10 = arith.constant 0.000000e+00 : f32
    %32 = vector.broadcast %cst_10 : f32 to vector<8x64xf32>
    %33 = arith.maximumf %31, %32 : vector<8x64xf32>
    %c0_11 = arith.constant 0 : index
    %c0_12 = arith.constant 0 : index
    %34 = vector.load %arg5[%c0_11, %c0_12] : memref<4x64xf32, #tpu.memory_space<vmem>>, vector<4x64xf32>
    %c0_13 = arith.constant 0 : index
    %c0_14 = arith.constant 0 : index
    %35 = vector.load %arg4[%c0_13, %c0_14] : memref<64x64xf32, #tpu.memory_space<vmem>>, vector<64x64xf32>
    %36 = vector.extract_strided_slice %34 {offsets = [0, 0], sizes = [1, 64], strides = [1, 1]} : vector<4x64xf32> to vector<1x64xf32>
    %37 = vector.extract_strided_slice %34 {offsets = [1, 0], sizes = [1, 64], strides = [1, 1]} : vector<4x64xf32> to vector<1x64xf32>
    %cst_15 = arith.constant dense<0.000000e+00> : vector<8x64xf32>
    %38 = tpu.matmul %33, %35, %cst_15 {dimension_numbers = #tpu.dot_dimension_numbers<[1], [0], [0], [1], [0, 0, 1, 1], [], []>} : vector<8x64xf32>, vector<64x64xf32>, vector<8x64xf32> -> vector<8x64xf32>
    %39 = vector.broadcast %36 : vector<1x64xf32> to vector<8x64xf32>
    %40 = arith.mulf %38, %39 : vector<8x64xf32>
    %41 = vector.broadcast %37 : vector<1x64xf32> to vector<8x64xf32>
    %42 = arith.addf %40, %41 : vector<8x64xf32>
    %43 = vector.extract_strided_slice %34 {offsets = [2, 0], sizes = [1, 64], strides = [1, 1]} : vector<4x64xf32> to vector<1x64xf32>
    %44 = vector.extract_strided_slice %34 {offsets = [3, 0], sizes = [1, 64], strides = [1, 1]} : vector<4x64xf32> to vector<1x64xf32>
    %cst_16 = arith.constant dense<0.000000e+00> : vector<8xf32>
    %45 = vector.multi_reduction <add>, %42, %cst_16 [1] : vector<8x64xf32> to vector<8xf32>
    %46 = vector.shape_cast %45 : vector<8xf32> to vector<8x1xf32>
    %cst_17 = arith.constant 6.400000e+01 : f32
    %47 = vector.broadcast %cst_17 : f32 to vector<8x1xf32>
    %48 = arith.divf %46, %47 : vector<8x1xf32>
    %49 = vector.broadcast %48 : vector<8x1xf32> to vector<8x64xf32>
    %50 = arith.subf %42, %49 : vector<8x64xf32>
    %51 = arith.mulf %50, %50 : vector<8x64xf32>
    %cst_18 = arith.constant dense<0.000000e+00> : vector<8xf32>
    %52 = vector.multi_reduction <add>, %51, %cst_18 [1] : vector<8x64xf32> to vector<8xf32>
    %53 = vector.shape_cast %52 : vector<8xf32> to vector<8x1xf32>
    %cst_19 = arith.constant 6.400000e+01 : f32
    %54 = vector.broadcast %cst_19 : f32 to vector<8x1xf32>
    %55 = arith.divf %53, %54 : vector<8x1xf32>
    %cst_20 = arith.constant 9.99999974E-6 : f32
    %56 = vector.broadcast %cst_20 : f32 to vector<8x1xf32>
    %57 = arith.addf %55, %56 : vector<8x1xf32>
    %58 = math.rsqrt %57 : vector<8x1xf32>
    %59 = vector.broadcast %58 : vector<8x1xf32> to vector<8x64xf32>
    %60 = arith.mulf %50, %59 : vector<8x64xf32>
    %61 = vector.broadcast %43 : vector<1x64xf32> to vector<8x64xf32>
    %62 = arith.mulf %60, %61 : vector<8x64xf32>
    %63 = vector.broadcast %44 : vector<1x64xf32> to vector<8x64xf32>
    %64 = arith.addf %62, %63 : vector<8x64xf32>
    %cst_21 = arith.constant 0.000000e+00 : f32
    %65 = vector.broadcast %cst_21 : f32 to vector<8x64xf32>
    %66 = arith.maximumf %64, %65 : vector<8x64xf32>
    %c0_22 = arith.constant 0 : index
    %c0_23 = arith.constant 0 : index
    %67 = vector.load %arg7[%c0_22, %c0_23] : memref<2x128xf32, #tpu.memory_space<vmem>>, vector<2x128xf32>
    %c0_24 = arith.constant 0 : index
    %c0_25 = arith.constant 0 : index
    %68 = vector.load %arg6[%c0_24, %c0_25] : memref<64x128xf32, #tpu.memory_space<vmem>>, vector<64x128xf32>
    %69 = vector.extract_strided_slice %67 {offsets = [0, 0], sizes = [1, 128], strides = [1, 1]} : vector<2x128xf32> to vector<1x128xf32>
    %70 = vector.extract_strided_slice %67 {offsets = [1, 0], sizes = [1, 128], strides = [1, 1]} : vector<2x128xf32> to vector<1x128xf32>
    %cst_26 = arith.constant dense<0.000000e+00> : vector<8x128xf32>
    %71 = tpu.matmul %66, %68, %cst_26 {dimension_numbers = #tpu.dot_dimension_numbers<[1], [0], [0], [1], [0, 0, 1, 1], [], []>} : vector<8x64xf32>, vector<64x128xf32>, vector<8x128xf32> -> vector<8x128xf32>
    %72 = vector.broadcast %69 : vector<1x128xf32> to vector<8x128xf32>
    %73 = arith.mulf %71, %72 : vector<8x128xf32>
    %74 = vector.broadcast %70 : vector<1x128xf32> to vector<8x128xf32>
    %75 = arith.addf %73, %74 : vector<8x128xf32>
    %c0_27 = arith.constant 0 : index
    %c0_28 = arith.constant 0 : index
    %76 = vector.load %arg8[%c0_27, %c0_28] : memref<8x128xf32, #tpu.memory_space<vmem>>, vector<8x128xf32>
    tpu.vector_store %arg8[%c0_27, %c0_28], %75 {strides = array<i32>} : memref<8x128xf32, #tpu.memory_space<vmem>>, vector<8x128xf32>,
    return
  }
  func.func @transform_0(%arg0: i32) -> (i32, i32) {
    %c0_i32 = arith.constant 0 : i32
    %c0_i32_0 = arith.constant 0 : i32
    return %arg0, %c0_i32 : i32, i32
  }
  func.func @transform_1(%arg0: i32) -> (i32, i32) {
    %c0_i32 = arith.constant 0 : i32
    %c0_i32_0 = arith.constant 0 : i32
    %c0_i32_1 = arith.constant 0 : i32
    return %c0_i32, %c0_i32_0 : i32, i32
  }
  func.func @transform_2(%arg0: i32) -> (i32, i32) {
    %c0_i32 = arith.constant 0 : i32
    %c0_i32_0 = arith.constant 0 : i32
    %c0_i32_1 = arith.constant 0 : i32
    return %c0_i32, %c0_i32_0 : i32, i32
  }
  func.func @transform_3(%arg0: i32) -> (i32, i32) {
    %c0_i32 = arith.constant 0 : i32
    %c0_i32_0 = arith.constant 0 : i32
    %c0_i32_1 = arith.constant 0 : i32
    return %c0_i32, %c0_i32_0 : i32, i32
  }
  func.func @transform_4(%arg0: i32) -> (i32, i32) {
    %c0_i32 = arith.constant 0 : i32
    %c0_i32_0 = arith.constant 0 : i32
    %c0_i32_1 = arith.constant 0 : i32
    return %c0_i32, %c0_i32_0 : i32, i32
  }
  func.func @transform_5(%arg0: i32) -> (i32, i32) {
    %c0_i32 = arith.constant 0 : i32
    %c0_i32_0 = arith.constant 0 : i32
    %c0_i32_1 = arith.constant 0 : i32
    return %c0_i32, %c0_i32_0 : i32, i32
  }
  func.func @transform_6(%arg0: i32) -> (i32, i32) {
    %c0_i32 = arith.constant 0 : i32
    %c0_i32_0 = arith.constant 0 : i32
    %c0_i32_1 = arith.constant 0 : i32
    return %c0_i32, %c0_i32_0 : i32, i32
  }
  func.func @transform_7(%arg0: i32) -> (i32, i32) {
    %c0_i32 = arith.constant 0 : i32
    %c0_i32_0 = arith.constant 0 : i32
    return %arg0, %c0_i32 : i32, i32
  }
}

</mosaic_0001>

<llo_original>
// kernel: tpu_custom_call.1
$region0: #{tpu_custom_call.1}
  #allocation0 [shape = 'u32[]', space=smem, size = 0x4, offset = 0x4, fixed_abs, tag = 'smem constant byte address 0x4 - core index']
  #allocation1 [shape = 'u32[144,128]{1,0:T(1,128)}', space=vmem, size = 0x12000, scoped, tag = 'internal scratch']
  %s0 = inlined_call_operand.hbm [shape: f32[8,32], index: 0, kind: input, shape index: {}]
  %s1 = inlined_call_operand.hbm [shape: f32[32,64], index: 1, kind: input, shape index: {}]
  %s2 = inlined_call_operand.hbm [shape: f32[4,64], index: 2, kind: input, shape index: {}]
  %s3 = inlined_call_operand.hbm [shape: f32[64,64], index: 3, kind: input, shape index: {}]
  %s4 = inlined_call_operand.vmem [shape: f32[4,64], index: 4, kind: input, shape index: {}]
  %s5 = inlined_call_operand.hbm [shape: f32[64,128], index: 5, kind: input, shape index: {}]
  %s6 = inlined_call_operand.vmem [shape: f32[2,128], index: 6, kind: input, shape index: {}]
  %s7 = inlined_call_operand.hbm [shape: f32[8,128], index: 7, kind: output, shape index: {}]
  %s8 = sld [smem:[#allocation0]]
  $region58: #{tpu_custom_call.1} parent=0
    _
  %s10 = ssub.s32 1, %s8
  %s11 = scalar_select 0, %s10, %s8
  $region1: #{tpu_custom_call.1} parent=0
    #allocation2 [shape = 'u8[4096]{0}', space=vmem, size = 0x1000, scoped, tag = 'input window, operand 0, single buffered']
    #allocation3 [shape = 's32[1]{0}', space=sflag, size = 0x4, scoped, tag = 'scoped memory for tpu_custom_call.1']
    #allocation4 [shape = 's32[1]{0}', space=sflag, size = 0x4, scoped, tag = 'scoped memory for tpu_custom_call.1']
    #allocation5 [shape = 'u8[16384]{0}', space=vmem, size = 0x4000, scoped, tag = 'input window, operand 1, single buffered']
    #allocation6 [shape = 's32[1]{0}', space=sflag, size = 0x4, scoped, tag = 'scoped memory for tpu_custom_call.1']
    #allocation7 [shape = 'u8[2048]{0}', space=vmem, size = 0x800, scoped, tag = 'input window, operand 2, single buffered']
    #allocation8 [shape = 'u8[32768]{0}', space=vmem, size = 0x8000, scoped, tag = 'input window, operand 3, single buffered']
    #allocation9 [shape = 's32[1]{0}', space=sflag, size = 0x4, scoped, tag = 'scoped memory for tpu_custom_call.1']
    #allocation10 [shape = 'u8[32768]{0}', space=vmem, size = 0x8000, scoped, tag = 'input window, operand 5, single buffered']
    #allocation11 [shape = 'u8[4096]{0}', space=vmem, size = 0x1000, scoped, tag = 'output window, operand 0, single buffered']
    %12 = vsyncpa [#allocation3], 0
    %13 = vsyncpa [#allocation6], 0
    %14 = vsyncpa [#allocation9], 0
    %15 = vsyncpa [#allocation4], 0
    // Predicated region
    $region2: #{tpu_custom_call.1} parent=1 // pred_check
      _
    $region3: #{tpu_custom_call.1} parent=1 // pred_check_branch
      %17 = sbr.rel (0) target = $region5
    $region4: #{tpu_custom_call.1} parent=1 // pred_region
      %s19 = ssub.s32 128, 128
      %20 = vsyncadd [#allocation3], %s19
      %s22 = sshll.u32 [#allocation2], 4
      %s23 = int_to_ptr.vmem [resolvable:$true] %s22
      %25 = dma.hbm_to_vmem [thread:$0]  %s0, 128, %s23, [#allocation3]
    $region5: #{tpu_custom_call.1} parent=1 // pred_fallthru
      _
    // Predicated region
    $region6: #{tpu_custom_call.1} parent=1 // pred_check
      _
    $region7: #{tpu_custom_call.1} parent=1 // pred_check_branch
      %27 = sbr.rel (0) target = $region9
    $region8: #{tpu_custom_call.1} parent=1 // pred_region
      %s29 = ssub.s32 512, 512
      %30 = vsyncadd [#allocation6], %s29
      %s31 = sshll.u32 [#allocation5], 4
      %s32 = int_to_ptr.vmem [resolvable:$true] %s31
      %37 = dma.hbm_to_vmem [thread:$0]  %s1, 512, %s32, [#allocation6], 128, 128, 8
    $region9: #{tpu_custom_call.1} parent=1 // pred_fallthru
      _
    // Predicated region
    $region10: #{tpu_custom_call.1} parent=1 // pred_check
      _
    $region11: #{tpu_custom_call.1} parent=1 // pred_check_branch
      %39 = sbr.rel (0) target = $region13
    $region12: #{tpu_custom_call.1} parent=1 // pred_region
      %s41 = ssub.s32 64, 64
      %42 = vsyncadd [#allocation6], %s41
      %s44 = sshll.u32 [#allocation7], 4
      %s45 = int_to_ptr.vmem [resolvable:$true] %s44
      %47 = dma.hbm_to_vmem [thread:$0]  %s2, 64, %s45, [#allocation6]
    $region13: #{tpu_custom_call.1} parent=1 // pred_fallthru
      _
    // Predicated region
    $region14: #{tpu_custom_call.1} parent=1 // pred_check
      _
    $region15: #{tpu_custom_call.1} parent=1 // pred_check_branch
      %49 = sbr.rel (0) target = $region17
    $region16: #{tpu_custom_call.1} parent=1 // pred_region
      %s51 = ssub.s32 1024, 1024
      %52 = vsyncadd [#allocation9], %s51
      %s53 = sshll.u32 [#allocation8], 4
      %s54 = int_to_ptr.vmem [resolvable:$true] %s53
      %59 = dma.hbm_to_vmem [thread:$0]  %s3, 1024, %s54, [#allocation9], 128, 128, 8
    $region17: #{tpu_custom_call.1} parent=1 // pred_fallthru
      _
    // Predicated region
    $region18: #{tpu_custom_call.1} parent=1 // pred_check
      _
    $region19: #{tpu_custom_call.1} parent=1 // pred_check_branch
      %61 = sbr.rel (0) target = $region21
    $region20: #{tpu_custom_call.1} parent=1 // pred_region
      _
    $region21: #{tpu_custom_call.1} parent=1 // pred_fallthru
      _
    // Predicated region
    $region22: #{tpu_custom_call.1} parent=1 // pred_check
      _
    $region23: #{tpu_custom_call.1} parent=1 // pred_check_branch
      %63 = sbr.rel (0) target = $region25
    $region24: #{tpu_custom_call.1} parent=1 // pred_region
      %s65 = ssub.s32 1024, 1024
      %66 = vsyncadd [#allocation9], %s65
      %s67 = sshll.u32 [#allocation10], 4
      %s68 = int_to_ptr.vmem [resolvable:$true] %s67
      %73 = dma.hbm_to_vmem [thread:$0]  %s5, 1024, %s68, [#allocation9], 128, 128, 8
    $region25: #{tpu_custom_call.1} parent=1 // pred_fallthru
      _
    // Predicated region
    $region26: #{tpu_custom_call.1} parent=1 // pred_check
      _
    $region27: #{tpu_custom_call.1} parent=1 // pred_check_branch
      %75 = sbr.rel (0) target = $region29
    $region28: #{tpu_custom_call.1} parent=1 // pred_region
      _
    $region29: #{tpu_custom_call.1} parent=1 // pred_fallthru
      _
    // Predicated region
    $region30: #{tpu_custom_call.1} parent=1 // pred_check
      _
    $region31: #{tpu_custom_call.1} parent=1 // pred_check_branch
      %77 = sbr.rel (0) target = $region33
    $region32: #{tpu_custom_call.1} parent=1 // pred_region
      %78 = dma.done [#allocation3], 128
    $region33: #{tpu_custom_call.1} parent=1 // pred_fallthru
      _
    // Predicated region
    $region34: #{tpu_custom_call.1} parent=1 // pred_check
      _
    $region35: #{tpu_custom_call.1} parent=1 // pred_check_branch
      %80 = sbr.rel (0) target = $region37
    $region36: #{tpu_custom_call.1} parent=1 // pred_region
      %81 = dma.done [#allocation6], 512
    $region37: #{tpu_custom_call.1} parent=1 // pred_fallthru
      _
    // Predicated region
    $region38: #{tpu_custom_call.1} parent=1 // pred_check
      _
    $region39: #{tpu_custom_call.1} parent=1 // pred_check_branch
      %83 = sbr.rel (0) target = $region41
    $region40: #{tpu_custom_call.1} parent=1 // pred_region
      %84 = dma.done [#allocation6], 64
    $region41: #{tpu_custom_call.1} parent=1 // pred_fallthru
      _
    // Predicated region
    $region42: #{tpu_custom_call.1} parent=1 // pred_check
      _
    $region43: #{tpu_custom_call.1} parent=1 // pred_check_branch
      %86 = sbr.rel (0) target = $region45
    $region44: #{tpu_custom_call.1} parent=1 // pred_region
      %87 = dma.done [#allocation9], 1024
    $region45: #{tpu_custom_call.1} parent=1 // pred_fallthru
      _
    // Predicated region
    $region46: #{tpu_custom_call.1} parent=1 // pred_check
      _
    $region47: #{tpu_custom_call.1} parent=1 // pred_check_branch
      %89 = sbr.rel (0) target = $region49
    $region48: #{tpu_custom_call.1} parent=1 // pred_region
      %90 = dma.done [#allocation9], 1024
    $region49: #{tpu_custom_call.1} parent=1 // pred_fallthru
      _
    %v91 = vld [vmem:[#allocation2] sm:$0xff]
    %v92 = vld [vmem:[#allocation7] sm:$0xf]
    %v93 = vld [vmem:[#allocation5] sm:$0xff]
    %v94 = vld [vmem:[#allocation5 + $0x8] sm:$0xff]
    %v95 = vld [vmem:[#allocation5 + $0x10] sm:$0xff]
    %v96 = vld [vmem:[#allocation5 + $0x18] sm:$0xff]
    %vm97 = vcmask 261120
    %v99 = vsel %vm97, %v91, 0
    %101 = vmatprep.subr.mxu0 0.0
    %102 = vmatpush1.msra.mxu0 0.0
    %103 = vmatprep.subr.mxu0 0.0
    %104 = vmatpush1.msra.mxu0 0.0
    %105 = vmatprep.subr.mxu0 0.0
    %106 = vmatpush1.msra.mxu0 0.0
    %107 = vmatprep.subr.mxu0 0.0
    %108 = vmatpush1.msra.mxu0 0.0
    %109 = vmatprep.subr.mxu0 0.0
    %110 = vmatpush1.msra.mxu0 0.0
    %111 = vmatprep.subr.mxu0 0.0
    %112 = vmatpush1.msra.mxu0 0.0
    %113 = vmatprep.subr.mxu0 0.0
    %114 = vmatpush1.msra.mxu0 0.0
    %115 = vmatprep.subr.mxu0 0.0
    %116 = vmatpush1.msra.mxu0 0.0
    %117 = vmatprep.subr.mxu0 0.0
    %118 = vmatpush1.msra.mxu0 0.0
    %119 = vmatprep.subr.mxu0 0.0
    %120 = vmatpush1.msra.mxu0 0.0
    %121 = vmatprep.subr.mxu0 0.0
    %122 = vmatpush1.msra.mxu0 0.0
    %123 = vmatprep.subr.mxu0 0.0
    %124 = vmatpush1.msra.mxu0 0.0
    %125 = vmatprep.subr.mxu0 0.0
    %126 = vmatpush1.msra.mxu0 %v96
    %127 = vmatprep.subr.mxu0 0.0
    %128 = vmatpush1.msra.mxu0 %v95
    %129 = vmatprep.subr.mxu0 0.0
    %130 = vmatpush1.msra.mxu0 %v94
    %131 = vmatprep.subr.mxu0 0.0
    %132 = vmatpush1.msra.mxu0 %v93
    %133 = vmatprep.subr.mxu0 0.0
    %134 = vmatpush2.msra.mxu0 0.0
    %135 = vmatprep.subr.mxu0 0.0
    %136 = vmatpush2.msra.mxu0 0.0
    %137 = vmatprep.subr.mxu0 0.0
    %138 = vmatpush2.msra.mxu0 0.0
    %139 = vmatprep.subr.mxu0 0.0
    %140 = vmatpush2.msra.mxu0 0.0
    %141 = vmatprep.subr.mxu0 0.0
    %142 = vmatpush2.msra.mxu0 0.0
    %143 = vmatprep.subr.mxu0 0.0
    %144 = vmatpush2.msra.mxu0 0.0
    %145 = vmatprep.subr.mxu0 0.0
    %146 = vmatpush2.msra.mxu0 0.0
    %147 = vmatprep.subr.mxu0 0.0
    %148 = vmatpush2.msra.mxu0 0.0
    %149 = vmatprep.subr.mxu0 0.0
    %150 = vmatpush2.msra.mxu0 0.0
    %151 = vmatprep.subr.mxu0 0.0
    %152 = vmatpush2.msra.mxu0 0.0
    %153 = vmatprep.subr.mxu0 0.0
    %154 = vmatpush2.msra.mxu0 0.0
    %155 = vmatprep.subr.mxu0 0.0
    %156 = vmatpush2.msra.mxu0 0.0
    %157 = vmatprep.subr.mxu0 0.0
    %158 = vmatpush2.msra.mxu0 0.0
    %159 = vmatprep.subr.mxu0 0.0
    %160 = vmatpush2.msra.mxu0 0.0
    %161 = vmatprep.subr.mxu0 0.0
    %162 = vmatpush2.msra.mxu0 0.0
    %163 = vmatprep.subr.mxu0 0.0
    %164 = vmatpush2.msra.mxu0 0.0
    %165 = vmatprep.mubr.f32.mxu0 0.0
    %166 = vmatmul.mubr.f32.gmra.mxu0 %v99
    %v167 = vpop.f32.mrf.mxu0
    %v168 = vadd.f32 0.0, %v167
    %v169 = vpop.f32.mrf.mxu0
    %170 = vdwg.mxu0
    %v171 = vlaneseq
    %v172 = vshrl.u32 %v171, 7
    %v173 = vsub.s32 0, %v172
    %v174 = vrot.slane %v92, %v173
    %v175 = vmul.f32 %v168, %v174
    %v176 = vlaneseq
    %v177 = vshrl.u32 %v176, 7
    %v178 = vsub.s32 1, %v177
    %v179 = vrot.slane %v92, %v178
    %v180 = vadd.f32 %v175, %v179
    %vm181 = vcmask 523264
    %v182 = vsel %vm181, %v180, 0.0
    %183 = vadd.xlane.f32.xlu0 %v182
    %v184 = vpop.xlane.xlu0 %183
    %v185 = vrcp.pop 64.0
    %v186 = vmul.f32 %v184, %v185
    %v187 = vsub.f32 %v180, %v186
    %v188 = vmul.f32 %v187, %v187
    %v189 = vsel %vm181, %v188, 0.0
    %190 = vadd.xlane.f32.xlu0 %v189
    %v191 = vpop.xlane.xlu0 %190
    %v192 = vmul.f32 %v191, %v185
    %v193 = vadd.f32 %v192, 1e-05
    %v194 = vrsqrt.pop %v193
    %v195 = vmul.f32 %v187, %v194
    %v196 = vlaneseq
    %v197 = vshrl.u32 %v196, 7
    %v198 = vsub.s32 2, %v197
    %v199 = vrot.slane %v92, %v198
    %v200 = vmul.f32 %v195, %v199
    %v201 = vlaneseq
    %v202 = vshrl.u32 %v201, 7
    %v203 = vsub.s32 3, %v202
    %v204 = vrot.slane %v92, %v203
    %v205 = vadd.f32 %v200, %v204
    %v206 = vmax.f32 %v205, 0.0
    %v207 = vld [vmem:[%s4] sm:$0xf]
    %v208 = vld [vmem:[#allocation8] sm:$0xff]
    %v209 = vld [vmem:[#allocation8 + $0x8] sm:$0xff]
    %v210 = vld [vmem:[#allocation8 + $0x10] sm:$0xff]
    %v211 = vld [vmem:[#allocation8 + $0x18] sm:$0xff]
    %v212 = vld [vmem:[#allocation8 + $0x20] sm:$0xff]
    %v213 = vld [vmem:[#allocation8 + $0x28] sm:$0xff]
    %v214 = vld [vmem:[#allocation8 + $0x30] sm:$0xff]
    %v215 = vld [vmem:[#allocation8 + $0x38] sm:$0xff]
    %v217 = vsel %vm181, %v206, 0
    %219 = vmatprep.subr.mxu0 0.0
    %220 = vmatpush1.msra.mxu0 0.0
    %221 = vmatprep.subr.mxu0 0.0
    %222 = vmatpush1.msra.mxu0 0.0
    %223 = vmatprep.subr.mxu0 0.0
    %224 = vmatpush1.msra.mxu0 0.0
    %225 = vmatprep.subr.mxu0 0.0
    %226 = vmatpush1.msra.mxu0 0.0
    %227 = vmatprep.subr.mxu0 0.0
    %228 = vmatpush1.msra.mxu0 0.0
    %229 = vmatprep.subr.mxu0 0.0
    %230 = vmatpush1.msra.mxu0 0.0
    %231 = vmatprep.subr.mxu0 0.0
    %232 = vmatpush1.msra.mxu0 0.0
    %233 = vmatprep.subr.mxu0 0.0
    %234 = vmatpush1.msra.mxu0 0.0
    %235 = vmatprep.subr.mxu0 0.0
    %236 = vmatpush1.msra.mxu0 %v215
    %237 = vmatprep.subr.mxu0 0.0
    %238 = vmatpush1.msra.mxu0 %v214
    %239 = vmatprep.subr.mxu0 0.0
    %240 = vmatpush1.msra.mxu0 %v213
    %241 = vmatprep.subr.mxu0 0.0
    %242 = vmatpush1.msra.mxu0 %v212
    %243 = vmatprep.subr.mxu0 0.0
    %244 = vmatpush1.msra.mxu0 %v211
    %245 = vmatprep.subr.mxu0 0.0
    %246 = vmatpush1.msra.mxu0 %v210
    %247 = vmatprep.subr.mxu0 0.0
    %248 = vmatpush1.msra.mxu0 %v209
    %249 = vmatprep.subr.mxu0 0.0
    %250 = vmatpush1.msra.mxu0 %v208
    %251 = vmatprep.subr.mxu0 0.0
    %252 = vmatpush2.msra.mxu0 0.0
    %253 = vmatprep.subr.mxu0 0.0
    %254 = vmatpush2.msra.mxu0 0.0
    %255 = vmatprep.subr.mxu0 0.0
    %256 = vmatpush2.msra.mxu0 0.0
    %257 = vmatprep.subr.mxu0 0.0
    %258 = vmatpush2.msra.mxu0 0.0
    %259 = vmatprep.subr.mxu0 0.0
    %260 = vmatpush2.msra.mxu0 0.0
    %261 = vmatprep.subr.mxu0 0.0
    %262 = vmatpush2.msra.mxu0 0.0
    %263 = vmatprep.subr.mxu0 0.0
    %264 = vmatpush2.msra.mxu0 0.0
    %265 = vmatprep.subr.mxu0 0.0
    %266 = vmatpush2.msra.mxu0 0.0
    %267 = vmatprep.subr.mxu0 0.0
    %268 = vmatpush2.msra.mxu0 0.0
    %269 = vmatprep.subr.mxu0 0.0
    %270 = vmatpush2.msra.mxu0 0.0
    %271 = vmatprep.subr.mxu0 0.0
    %272 = vmatpush2.msra.mxu0 0.0
    %273 = vmatprep.subr.mxu0 0.0
    %274 = vmatpush2.msra.mxu0 0.0
    %275 = vmatprep.subr.mxu0 0.0
    %276 = vmatpush2.msra.mxu0 0.0
    %277 = vmatprep.subr.mxu0 0.0
    %278 = vmatpush2.msra.mxu0 0.0
    %279 = vmatprep.subr.mxu0 0.0
    %280 = vmatpush2.msra.mxu0 0.0
    %281 = vmatprep.subr.mxu0 0.0
    %282 = vmatpush2.msra.mxu0 0.0
    %283 = vmatprep.mubr.f32.mxu0 0.0
    %284 = vmatmul.mubr.f32.gmra.mxu0 %v217
    %v285 = vpop.f32.mrf.mxu0
    %v286 = vadd.f32 0.0, %v285
    %v287 = vpop.f32.mrf.mxu0
    %288 = vdwg.mxu0
    %v289 = vlaneseq
    %v290 = vshrl.u32 %v289, 7
    %v291 = vsub.s32 0, %v290
    %v292 = vrot.slane %v207, %v291
    %v293 = vmul.f32 %v286, %v292
    %v294 = vlaneseq
    %v295 = vshrl.u32 %v294, 7
    %v296 = vsub.s32 1, %v295
    %v297 = vrot.slane %v207, %v296
    %v298 = vadd.f32 %v293, %v297
    %v299 = vsel %vm181, %v298, 0.0
    %300 = vadd.xlane.f32.xlu0 %v299
    %v301 = vpop.xlane.xlu0 %300
    %v302 = vmul.f32 %v301, %v185
    %v303 = vsub.f32 %v298, %v302
    %v304 = vmul.f32 %v303, %v303
    %v305 = vsel %vm181, %v304, 0.0
    %306 = vadd.xlane.f32.xlu0 %v305
    %v307 = vpop.xlane.xlu0 %306
    %v308 = vmul.f32 %v307, %v185
    %v309 = vadd.f32 %v308, 1e-05
    %v310 = vrsqrt.pop %v309
    %v311 = vmul.f32 %v303, %v310
    %v312 = vlaneseq
    %v313 = vshrl.u32 %v312, 7
    %v314 = vsub.s32 2, %v313
    %v315 = vrot.slane %v207, %v314
    %v316 = vmul.f32 %v311, %v315
    %v317 = vlaneseq
    %v318 = vshrl.u32 %v317, 7
    %v319 = vsub.s32 3, %v318
    %v320 = vrot.slane %v207, %v319
    %v321 = vadd.f32 %v316, %v320
    %v322 = vmax.f32 %v321, 0.0
    %v323 = vld [vmem:[%s6] sm:$0x3]
    %v324 = vld [vmem:[#allocation10] sm:$0xff]
    %v325 = vld [vmem:[#allocation10 + $0x8] sm:$0xff]
    %v326 = vld [vmem:[#allocation10 + $0x10] sm:$0xff]
    %v327 = vld [vmem:[#allocation10 + $0x18] sm:$0xff]
    %v328 = vld [vmem:[#allocation10 + $0x20] sm:$0xff]
    %v329 = vld [vmem:[#allocation10 + $0x28] sm:$0xff]
    %v330 = vld [vmem:[#allocation10 + $0x30] sm:$0xff]
    %v331 = vld [vmem:[#allocation10 + $0x38] sm:$0xff]
    %v333 = vsel %vm181, %v322, 0
    %335 = vmatprep.subr.mxu0 0.0
    %336 = vmatpush1.msra.mxu0 0.0
    %337 = vmatprep.subr.mxu0 0.0
    %338 = vmatpush1.msra.mxu0 0.0
    %339 = vmatprep.subr.mxu0 0.0
    %340 = vmatpush1.msra.mxu0 0.0
    %341 = vmatprep.subr.mxu0 0.0
    %342 = vmatpush1.msra.mxu0 0.0
    %343 = vmatprep.subr.mxu0 0.0
    %344 = vmatpush1.msra.mxu0 0.0
    %345 = vmatprep.subr.mxu0 0.0
    %346 = vmatpush1.msra.mxu0 0.0
    %347 = vmatprep.subr.mxu0 0.0
    %348 = vmatpush1.msra.mxu0 0.0
    %349 = vmatprep.subr.mxu0 0.0
    %350 = vmatpush1.msra.mxu0 0.0
    %351 = vmatprep.subr.mxu0 0.0
    %352 = vmatpush1.msra.mxu0 %v331
    %353 = vmatprep.subr.mxu0 0.0
    %354 = vmatpush1.msra.mxu0 %v330
    %355 = vmatprep.subr.mxu0 0.0
    %356 = vmatpush1.msra.mxu0 %v329
    %357 = vmatprep.subr.mxu0 0.0
    %358 = vmatpush1.msra.mxu0 %v328
    %359 = vmatprep.subr.mxu0 0.0
    %360 = vmatpush1.msra.mxu0 %v327
    %361 = vmatprep.subr.mxu0 0.0
    %362 = vmatpush1.msra.mxu0 %v326
    %363 = vmatprep.subr.mxu0 0.0
    %364 = vmatpush1.msra.mxu0 %v325
    %365 = vmatprep.subr.mxu0 0.0
    %366 = vmatpush1.msra.mxu0 %v324
    %367 = vmatprep.subr.mxu0 0.0
    %368 = vmatpush2.msra.mxu0 0.0
    %369 = vmatprep.subr.mxu0 0.0
    %370 = vmatpush2.msra.mxu0 0.0
    %371 = vmatprep.subr.mxu0 0.0
    %372 = vmatpush2.msra.mxu0 0.0
    %373 = vmatprep.subr.mxu0 0.0
    %374 = vmatpush2.msra.mxu0 0.0
    %375 = vmatprep.subr.mxu0 0.0
    %376 = vmatpush2.msra.mxu0 0.0
    %377 = vmatprep.subr.mxu0 0.0
    %378 = vmatpush2.msra.mxu0 0.0
    %379 = vmatprep.subr.mxu0 0.0
    %380 = vmatpush2.msra.mxu0 0.0
    %381 = vmatprep.subr.mxu0 0.0
    %382 = vmatpush2.msra.mxu0 0.0
    %383 = vmatprep.subr.mxu0 0.0
    %384 = vmatpush2.msra.mxu0 0.0
    %385 = vmatprep.subr.mxu0 0.0
    %386 = vmatpush2.msra.mxu0 0.0
    %387 = vmatprep.subr.mxu0 0.0
    %388 = vmatpush2.msra.mxu0 0.0
    %389 = vmatprep.subr.mxu0 0.0
    %390 = vmatpush2.msra.mxu0 0.0
    %391 = vmatprep.subr.mxu0 0.0
    %392 = vmatpush2.msra.mxu0 0.0
    %393 = vmatprep.subr.mxu0 0.0
    %394 = vmatpush2.msra.mxu0 0.0
    %395 = vmatprep.subr.mxu0 0.0
    %396 = vmatpush2.msra.mxu0 0.0
    %397 = vmatprep.subr.mxu0 0.0
    %398 = vmatpush2.msra.mxu0 0.0
    %399 = vmatprep.mubr.f32.mxu0 0.0
    %400 = vmatmul.mubr.f32.gmra.mxu0 %v333
    %v401 = vpop.f32.mrf.mxu0
    %v402 = vadd.f32 0.0, %v401
    %v403 = vpop.f32.mrf.mxu0
    %404 = vdwg.mxu0
    %v405 = vlaneseq
    %v406 = vshrl.u32 %v405, 7
    %v407 = vsub.s32 0, %v406
    %v408 = vrot.slane %v323, %v407
    %v409 = vmul.f32 %v402, %v408
    %v410 = vlaneseq
    %v411 = vshrl.u32 %v410, 7
    %v412 = vsub.s32 1, %v411
    %v413 = vrot.slane %v323, %v412
    %v414 = vadd.f32 %v409, %v413
    %415 = vst [vmem:[#allocation11] sm:$0xff] %v414
    // Predicated region
    $region50: #{tpu_custom_call.1} parent=1 // pred_check
      _
    $region51: #{tpu_custom_call.1} parent=1 // pred_check_branch
      %417 = sbr.rel (0) target = $region53
    $region52: #{tpu_custom_call.1} parent=1 // pred_region
      %s419 = ssub.s32 128, 128
      %420 = vsyncadd [#allocation4], %s419
      %s422 = sshll.u32 [#allocation11], 4
      %s423 = int_to_ptr.vmem [resolvable:$true] %s422
      %425 = dma.vmem_to_hbm [thread:$0]  %s423, 128, %s7, [#allocation4]
    $region53: #{tpu_custom_call.1} parent=1 // pred_fallthru
      _
    // Predicated region
    $region54: #{tpu_custom_call.1} parent=1 // pred_check
      _
    $region55: #{tpu_custom_call.1} parent=1 // pred_check_branch
      %427 = sbr.rel (0) target = $region57
    $region56: #{tpu_custom_call.1} parent=1 // pred_region
      %428 = dma.done [#allocation4], 128
    $region57: #{tpu_custom_call.1} parent=1 // pred_fallthru
      _
    %429 = vsyncpa [#allocation3], 1
    %430 = vsyncpa [#allocation6], 1
    %431 = vsyncpa [#allocation9], 1
    %432 = vsyncpa [#allocation4], 1

</llo_original>
